<compile_context>
chip_gen: v7x
topology: tpu7x:2x2x1
jax: 0.10.0
libtpu: 0.0.40
codegen_flags: <defaults>
</compile_context>

<pallas_src>
import functools

import jax
import jax.numpy as jnp
from jax.experimental import pallas as pl
from jax.experimental.pallas import tpu as pltpu

D_IN = 2 * 16 + 1      # cnn_hidden_size * 2 + 1 = 33
D_OUT = 22 - 1         # vocab_size - 1 = 21
LN_EPS = 1e-12         # args.layer_norm_eps


def _round_up(x, m):
    return ((x + m - 1) // m) * m


def _bytenet_decoder_kernel(x_ref, w1_ref, b1_ref, w2_ref, b2_ref, o_ref,
                            *, rc, n_chunks):
    f32 = jnp.float32
    # Tiny resident operands: load once per grid step, live in vregs.
    w1 = w1_ref[...]            # (33, 33) native dtype (bf16 consumed directly)
    b1 = b1_ref[...]            # (1, 33) f32
    w2 = w2_ref[...]            # (33, 21) f32, gamma already folded in
    b2 = b2_ref[...]            # (1, 21) f32, beta @ W2 + b2 already folded in
    ones_col = jnp.ones((D_IN, 1), dtype=f32)   # MXU row-sum reducer (hoisted)
    inv_d = 1.0 / D_IN

    # Strip-mine the (tm, 33) tile in rc-row sub-chunks so intermediates stay
    # in vregs (no VMEM-materialized full-tile temporaries).
    @pl.loop(0, n_chunks)
    def _(c):
        r0 = pl.multiple_of(c * rc, rc)
        x = x_ref[pl.ds(r0, rc), :]                              # (rc, 33)

        # dense + ReLU  (MXU + VPU), f32 accumulator regardless of input dtype
        h = jnp.dot(x, w1, preferred_element_type=f32) + b1
        h = jnp.maximum(h, 0.0)

        # LayerNorm stats via MXU row-sums: var = E[h^2] - mean^2.
        # Per-row dots -> garbage rows in a ragged tail cannot contaminate
        # valid rows; results for those rows are discarded by the masked
        # HBM write-back anyway.
        s1 = jnp.dot(h, ones_col, preferred_element_type=f32)     # sum(h)
        s2 = jnp.dot(h * h, ones_col, preferred_element_type=f32)  # sum(h^2)
        mean = s1 * inv_d
        var = jnp.maximum(s2 * inv_d - mean * mean, 0.0)
        inv_std = jax.lax.rsqrt(var + LN_EPS)                     # EUP
        hn = (h - mean) * inv_std                                  # (rc, 33) f32

        # decoder (gamma/beta folded into w2/b2)  (MXU)
        out = jnp.dot(hn, w2, preferred_element_type=f32) + b2     # (rc, 21)
        o_ref[pl.ds(r0, rc), :] = out.astype(o_ref.dtype)


def bytenet_decoder(features, w1, b1, gamma, beta, w2, b2, *,
                    tm=8192, out_dtype=None):
    """features: (batch, seq, D_IN) -> (batch, seq, D_OUT)."""
    batch, seq, d = features.shape
    assert d == D_IN
    rows = batch * seq
    x2d = features.reshape(rows, d)                  # metadata-only reshape
    out_dtype = features.dtype if out_dtype is None else jnp.dtype(out_dtype)

    f32 = jnp.float32
    # Fold the LayerNorm affine into the decoder matmul (wrapper-side, tiny).
    w2_eff = gamma.astype(f32)[:, None] * w2.astype(f32)            # (33, 21)
    b2_eff = (beta.astype(f32) @ w2.astype(f32) + b2.astype(f32))   # (21,)

    # Tile sizing:
    #  - cap at ceil(rows/2) so the grid has >= 2 steps (both v7x TCs work),
    #  - multiple of 8 (f32 sublane tiling); no wrapper-side row padding,
    #  - strip-mine in rc=128-row sub-chunks when the tile is large enough.
    half_rows = _round_up(pl.cdiv(rows, 2), 8)
    tm = max(8, min(tm, half_rows))
    tm = _round_up(tm, 8)
    if tm >= 128:
        tm = _round_up(tm, 128)
        rc = 128
    else:
        rc = tm
    n_chunks = tm // rc
    grid = (pl.cdiv(rows, tm),)

    b1_2d = b1.astype(f32).reshape(1, D_IN)
    b2_2d = b2_eff.reshape(1, D_OUT)

    x_bytes = x2d.dtype.itemsize
    o_bytes = out_dtype.itemsize
    cost = pl.CostEstimate(
        flops=rows * 2 * D_IN * (D_IN + D_OUT + 2),
        transcendentals=rows,
        bytes_accessed=rows * (D_IN * x_bytes + D_OUT * o_bytes))

    kernel = functools.partial(_bytenet_decoder_kernel, rc=rc, n_chunks=n_chunks)

    out = pl.pallas_call(
        kernel,
        out_shape=jax.ShapeDtypeStruct((rows, D_OUT), out_dtype),
        grid_spec=pl.GridSpec(
            grid=grid,
            in_specs=[
                pl.BlockSpec((tm, D_IN), lambda i: (i, 0)),      # x row tile
                pl.BlockSpec((D_IN, D_IN), lambda i: (0, 0)),    # W1 (resident)
                pl.BlockSpec((1, D_IN), lambda i: (0, 0)),       # b1
                pl.BlockSpec((D_IN, D_OUT), lambda i: (0, 0)),   # W2' = gamma*W2
                pl.BlockSpec((1, D_OUT), lambda i: (0, 0)),      # b2' = beta@W2+b2
            ],
            out_specs=pl.BlockSpec((tm, D_OUT), lambda i: (i, 0)),
        ),
        compiler_params=pltpu.CompilerParams(
            dimension_semantics=("parallel",),
            # Lane-padded f32 I/O double buffers at tm=8192 are ~16 MiB; raise
            # the scoped limit explicitly (still well under v7x's 64 MiB/TC).
            vmem_limit_bytes=48 * 1024 * 1024),
        cost_estimate=cost,
    )(x2d, w1, b1_2d, w2_eff, b2_2d)

    return out.reshape(batch, seq, D_OUT)


def _reference(features, w1, b1, gamma, beta, w2, b2):
    x = features @ w1 + b1
    x = jnp.maximum(x, 0.0)
    mean = jnp.mean(x, axis=-1, keepdims=True)
    var = jnp.mean((x - mean) ** 2, axis=-1, keepdims=True)
    x = (x - mean) / jnp.sqrt(var + LN_EPS) * gamma + beta
    return x @ w2 + b2


if __name__ == "__main__":
    key = jax.random.PRNGKey(0)
    (k_feat, k_feat2, k_feat3, k_w1, k_b1, k_g, k_be, k_w2, k_b2) = \
        jax.random.split(key, 9)

    # Deterministic parameter init (PyTorch Linear-style uniform bounds).
    bound1 = 1.0 / (D_IN ** 0.5)
    w1 = jax.random.uniform(k_w1, (D_IN, D_IN), jnp.float32, -bound1, bound1)
    b1 = jax.random.uniform(k_b1, (D_IN,), jnp.float32, -bound1, bound1)
    gamma = 1.0 + 0.1 * jax.random.uniform(k_g, (D_IN,), jnp.float32, -1.0, 1.0)
    beta = 0.1 * jax.random.uniform(k_be, (D_IN,), jnp.float32, -1.0, 1.0)
    w2 = jax.random.uniform(k_w2, (D_IN, D_OUT), jnp.float32, -bound1, bound1)
    b2 = jax.random.uniform(k_b2, (D_OUT,), jnp.float32, -bound1, bound1)

    # 1) Small shape consistent with the module: batch=2, seq=8, D=33.
    batch, seq = 2, 8
    features = jax.random.normal(k_feat, (batch, seq, D_IN), dtype=jnp.float32)
    out = jax.block_until_ready(
        bytenet_decoder(features, w1, b1, gamma, beta, w2, b2))
    ref = _reference(features, w1, b1, gamma, beta, w2, b2)
    assert out.shape == (batch, seq, D_OUT)
    assert jnp.allclose(out, ref, atol=2e-4, rtol=2e-4), "mismatch vs reference"

    # 2) Ragged-tail check: rows (=70) not a multiple of the row tile (tm=32),
    #    exercising the no-pad path with a partial last grid block.
    batch2, seq2 = 2, 35    # gen_max_len = 35
    features2 = jax.random.normal(k_feat2, (batch2, seq2, D_IN), dtype=jnp.float32)
    out2 = jax.block_until_ready(
        bytenet_decoder(features2, w1, b1, gamma, beta, w2, b2, tm=32))
    ref2 = _reference(features2, w1, b1, gamma, beta, w2, b2)
    assert out2.shape == (batch2, seq2, D_OUT)
    assert jnp.allclose(out2, ref2, atol=2e-4, rtol=2e-4), "ragged-tail mismatch"

    # 3) Multi-sub-chunk check: rows=560 -> tm=384 (rc=128, 3 sub-chunks),
    #    grid of 2 steps with a ragged tail inside the last block.
    batch3, seq3 = 16, 35
    features3 = jax.random.normal(k_feat3, (batch3, seq3, D_IN), dtype=jnp.float32)
    out3 = jax.block_until_ready(
        bytenet_decoder(features3, w1, b1, gamma, beta, w2, b2))
    ref3 = _reference(features3, w1, b1, gamma, beta, w2, b2)
    assert out3.shape == (batch3, seq3, D_OUT)
    assert jnp.allclose(out3, ref3, atol=2e-4, rtol=2e-4), "strip-mine mismatch"

    print("KERNEL_OK")
</pallas_src>

<mosaic_0001>
module attributes {stable_mosaic.version = 11 : i64} {
  func.func @_bytenet_decoder_kernel(%arg0: i32, %arg1: memref<8x33xf32, #tpu.memory_space<vmem>>, %arg2: memref<33x33xf32, #tpu.memory_space<vmem>>, %arg3: memref<1x33xf32, #tpu.memory_space<vmem>>, %arg4: memref<33x21xf32, #tpu.memory_space<vmem>>, %arg5: memref<1x21xf32, #tpu.memory_space<vmem>>, %arg6: memref<8x21xf32, #tpu.memory_space<vmem>>) attributes {dimension_semantics = [#tpu.dimension_semantics<parallel>], iteration_bounds = array<i64: 2>, scalar_prefetch = 0 : i64, scratch_operands = 0 : i64, tpu.core_type = #tpu.core_type<tc>, window_params = [{transform_indices = @transform_0, window_bounds = array<i64: 8, 33>}, {pipeline_mode = #tpu.pipeline_mode<synchronous>, transform_indices = @transform_1, window_bounds = array<i64: 33, 33>}, {pipeline_mode = #tpu.pipeline_mode<synchronous>, transform_indices = @transform_2, window_bounds = array<i64: 1, 33>}, {pipeline_mode = #tpu.pipeline_mode<synchronous>, transform_indices = @transform_3, window_bounds = array<i64: 33, 21>}, {pipeline_mode = #tpu.pipeline_mode<synchronous>, transform_indices = @transform_4, window_bounds = array<i64: 1, 21>}, {transform_indices = @transform_5, window_bounds = array<i64: 8, 21>}]} {
    %c0 = arith.constant 0 : index
    %c0_0 = arith.constant 0 : index
    %0 = vector.load %arg2[%c0, %c0_0] : memref<33x33xf32, #tpu.memory_space<vmem>>, vector<33x33xf32>
    %c0_1 = arith.constant 0 : index
    %c0_2 = arith.constant 0 : index
    %1 = vector.load %arg3[%c0_1, %c0_2] : memref<1x33xf32, #tpu.memory_space<vmem>>, vector<1x33xf32>
    %c0_3 = arith.constant 0 : index
    %c0_4 = arith.constant 0 : index
    %2 = vector.load %arg4[%c0_3, %c0_4] : memref<33x21xf32, #tpu.memory_space<vmem>>, vector<33x21xf32>
    %c0_5 = arith.constant 0 : index
    %c0_6 = arith.constant 0 : index
    %3 = vector.load %arg5[%c0_5, %c0_6] : memref<1x21xf32, #tpu.memory_space<vmem>>, vector<1x21xf32>
    %cst = arith.constant 1.000000e+00 : f32
    %4 = vector.broadcast %cst : f32 to vector<33x1xf32>
    %c0_i32 = arith.constant 0 : i32
    %c1_i32 = arith.constant 1 : i32
    %5 = arith.muli %c0_i32, %c1_i32 : i32
    %c0_i32_7 = arith.constant 0 : i32
    %6 = arith.addi %c0_i32_7, %5 : i32
    %c8_i32 = arith.constant 8 : i32
    %7 = arith.muli %6, %c8_i32 : i32
    %8 = tpu.assume_multiple %7, 8 : i32
    %9 = arith.index_cast %8 : i32 to index
    %c0_8 = arith.constant 0 : index
    %10 = vector.load %arg1[%9, %c0_8] : memref<8x33xf32, #tpu.memory_space<vmem>>, vector<8x33xf32>
    %cst_9 = arith.constant dense<0.000000e+00> : vector<8x33xf32>
    %11 = tpu.matmul %10, %0, %cst_9 {dimension_numbers = #tpu.dot_dimension_numbers<[1], [0], [0], [1], [0, 0, 1, 1], [], []>} : vector<8x33xf32>, vector<33x33xf32>, vector<8x33xf32> -> vector<8x33xf32>
    %12 = vector.broadcast %1 : vector<1x33xf32> to vector<8x33xf32>
    %13 = arith.addf %11, %12 : vector<8x33xf32>
    %cst_10 = arith.constant 0.000000e+00 : f32
    %14 = vector.broadcast %cst_10 : f32 to vector<8x33xf32>
    %15 = arith.maximumf %13, %14 : vector<8x33xf32>
    %cst_11 = arith.constant dense<0.000000e+00> : vector<8x1xf32>
    %16 = tpu.matmul %15, %4, %cst_11 {dimension_numbers = #tpu.dot_dimension_numbers<[1], [0], [0], [1], [0, 0, 1, 1], [], []>} : vector<8x33xf32>, vector<33x1xf32>, vector<8x1xf32> -> vector<8x1xf32>
    %17 = arith.mulf %15, %15 : vector<8x33xf32>
    %cst_12 = arith.constant dense<0.000000e+00> : vector<8x1xf32>
    %18 = tpu.matmul %17, %4, %cst_12 {dimension_numbers = #tpu.dot_dimension_numbers<[1], [0], [0], [1], [0, 0, 1, 1], [], []>} : vector<8x33xf32>, vector<33x1xf32>, vector<8x1xf32> -> vector<8x1xf32>
    %cst_13 = arith.constant 0.0303030312 : f32
    %19 = vector.broadcast %cst_13 : f32 to vector<8x1xf32>
    %20 = arith.mulf %16, %19 : vector<8x1xf32>
    %cst_14 = arith.constant 0.0303030312 : f32
    %21 = vector.broadcast %cst_14 : f32 to vector<8x1xf32>
    %22 = arith.mulf %18, %21 : vector<8x1xf32>
    %23 = arith.mulf %20, %20 : vector<8x1xf32>
    %24 = arith.subf %22, %23 : vector<8x1xf32>
    %cst_15 = arith.constant 0.000000e+00 : f32
    %25 = vector.broadcast %cst_15 : f32 to vector<8x1xf32>
    %26 = arith.maximumf %24, %25 : vector<8x1xf32>
    %cst_16 = arith.constant 9.99999996E-13 : f32
    %27 = vector.broadcast %cst_16 : f32 to vector<8x1xf32>
    %28 = arith.addf %26, %27 : vector<8x1xf32>
    %29 = math.rsqrt %28 : vector<8x1xf32>
    %30 = vector.broadcast %20 : vector<8x1xf32> to vector<8x33xf32>
    %31 = arith.subf %15, %30 : vector<8x33xf32>
    %32 = vector.broadcast %29 : vector<8x1xf32> to vector<8x33xf32>
    %33 = arith.mulf %31, %32 : vector<8x33xf32>
    %cst_17 = arith.constant dense<0.000000e+00> : vector<8x21xf32>
    %34 = tpu.matmul %33, %2, %cst_17 {dimension_numbers = #tpu.dot_dimension_numbers<[1], [0], [0], [1], [0, 0, 1, 1], [], []>} : vector<8x33xf32>, vector<33x21xf32>, vector<8x21xf32> -> vector<8x21xf32>
    %35 = vector.broadcast %3 : vector<1x21xf32> to vector<8x21xf32>
    %36 = arith.addf %34, %35 : vector<8x21xf32>
    %37 = arith.index_cast %8 : i32 to index
    %c0_18 = arith.constant 0 : index
    %38 = vector.load %arg6[%37, %c0_18] : memref<8x21xf32, #tpu.memory_space<vmem>>, vector<8x21xf32>
    tpu.vector_store %arg6[%37, %c0_18], %36 {strides = array<i32>} : memref<8x21xf32, #tpu.memory_space<vmem>>, vector<8x21xf32>,
    %c1_i32_19 = arith.constant 1 : i32
    return
  }
  func.func @transform_0(%arg0: i32) -> (i32, i32) {
    %c0_i32 = arith.constant 0 : i32
    %c0_i32_0 = arith.constant 0 : i32
    return %arg0, %c0_i32 : i32, i32
  }
  func.func @transform_1(%arg0: i32) -> (i32, i32) {
    %c0_i32 = arith.constant 0 : i32
    %c0_i32_0 = arith.constant 0 : i32
    %c0_i32_1 = arith.constant 0 : i32
    return %c0_i32, %c0_i32_0 : i32, i32
  }
  func.func @transform_2(%arg0: i32) -> (i32, i32) {
    %c0_i32 = arith.constant 0 : i32
    %c0_i32_0 = arith.constant 0 : i32
    %c0_i32_1 = arith.constant 0 : i32
    return %c0_i32, %c0_i32_0 : i32, i32
  }
  func.func @transform_3(%arg0: i32) -> (i32, i32) {
    %c0_i32 = arith.constant 0 : i32
    %c0_i32_0 = arith.constant 0 : i32
    %c0_i32_1 = arith.constant 0 : i32
    return %c0_i32, %c0_i32_0 : i32, i32
  }
  func.func @transform_4(%arg0: i32) -> (i32, i32) {
    %c0_i32 = arith.constant 0 : i32
    %c0_i32_0 = arith.constant 0 : i32
    %c0_i32_1 = arith.constant 0 : i32
    return %c0_i32, %c0_i32_0 : i32, i32
  }
  func.func @transform_5(%arg0: i32) -> (i32, i32) {
    %c0_i32 = arith.constant 0 : i32
    %c0_i32_0 = arith.constant 0 : i32
    return %arg0, %c0_i32 : i32, i32
  }
}

</mosaic_0001>

<llo_original>
// kernel: tpu_custom_call.1
$region0: #{tpu_custom_call.1}
  #allocation0 [shape = 'u32[]', space=smem, size = 0x4, offset = 0x4, fixed_abs, tag = 'smem constant byte address 0x4 - core index']
  #allocation1 [shape = 'u32[144,128]{1,0:T(1,128)}', space=vmem, size = 0x12000, scoped, tag = 'internal scratch']
  %s0 = inlined_call_operand.vmem [shape: f32[16,33], index: 0, kind: input, shape index: {}]
  %s1 = inlined_call_operand.vmem [shape: f32[33,33], index: 1, kind: input, shape index: {}]
  %s2 = inlined_call_operand.vmem [shape: f32[1,33], index: 2, kind: input, shape index: {}]
  %s3 = inlined_call_operand.vmem [shape: f32[33,21], index: 3, kind: input, shape index: {}]
  %s4 = inlined_call_operand.vmem [shape: f32[1,21], index: 4, kind: input, shape index: {}]
  %s5 = inlined_call_operand.hbm [shape: f32[16,21], index: 5, kind: output, shape index: {}]
  %s6 = sld [smem:[#allocation0]]
  $region53: #{tpu_custom_call.1} parent=0
    _
  %s8 = ssub.s32 1, %s6
  %s9 = scalar_select 0, %s8, %s6
  $region1: #{tpu_custom_call.1} parent=0
    #allocation2 [shape = 'u8[8192]{0}', space=vmem, size = 0x2000, scoped, tag = 'output window, operand 0']
    #allocation3 [shape = 's32[2]{0}', space=sflag, size = 0x8, scoped, tag = 'scoped memory for tpu_custom_call.1']
    %10 = vsyncpa [#allocation3], 0
    %s11 = scalar_lea.sflag [#allocation3], 1
    %12 = vsyncpa %s11, 0
    loop: start=0, step=1, limit=4
    $region2: #{tpu_custom_call.1} parent=1 // loop_pre_header
      _
    $region3: #{tpu_custom_call.1} parent=1 // loop_header
      %s14 = sphi 0, %s18
      %p15 = scmp.ge.s32.totalorder %s14, 4
      %s24 = sphi 0, %s26
      %s27 = sphi 0, %s24
      %s28 = sphi 0, %s27
      %s44 = sphi 0, %s28
      %s48 = sphi 0, %s48
      %s50 = sphi 0, %s48
      %s51 = sphi 0, %s50
      %s65 = sphi 0, %s51
      %s69 = sphi 0, %s69
      %s71 = sphi 0, %s69
      %s72 = sphi 0, %s71
      %s86 = sphi 0, %s72
      %s90 = sphi 0, %s90
      %s92 = sphi 0, %s90
      %s93 = sphi 0, %s92
      %s107 = sphi 0, %s93
      %s111 = sphi 0, %s111
      %s113 = sphi 0, %s111
      %s114 = sphi 0, %s113
      %s128 = sphi 0, %s114
      %s134 = sphi 0, %s136
      %s137 = sphi 0, %s134
      %s138 = sphi 0, %s137
      %s154 = sphi 0, %s138
    $region4: #{tpu_custom_call.1} parent=1 // loop_header_branch
      %17 = sbr.rel (%p15) target = $region8
    $region5: #{tpu_custom_call.1} parent=1 // loop_body
      %s19 = ssub.s32 %s14, 1
      %s20 = ssub.s32 %s14, 2
      %s21 = sadd.s32 %s14, 1
      %s22 = ssub.s32 %s14, %s21
      %p23 = scmp.eq.s32.totalorder %s22, 0
      %s25 = sadd.s32 %s24, 1
      %s26 = scalar_select %p23, %s24, %s25
      %p29 = pneg %p23
      %p30 = scmp.eq.s32.totalorder %s14, 1
      %p31 = por %p29, %p30
      %p32 = scmp.ne.s32.totalorder %s24, %s27
      %p33 = scmp.eq.s32.totalorder %s14, 0
      %p34 = por %p32, %p33
      %p35 = scmp.ne.s32.totalorder %s24, %s27
      %p36 = scmp.eq.s32.totalorder %s19, 1
      %p37 = por %p35, %p36
      %p38 = scmp.ne.s32.totalorder %s27, %s28
      %p39 = scmp.eq.s32.totalorder %s19, 0
      %p40 = por %p38, %p39
      %p41 = scmp.ne.s32.totalorder %s27, %s28
      %p42 = scmp.eq.s32.totalorder %s20, 1
      %p43 = por %p41, %p42
      %p45 = scmp.ne.s32.totalorder %s28, %s44
      %p46 = scmp.eq.s32.totalorder %s20, 0
      %p47 = por %p45, %p46
      %s49 = sadd.s32 %s48, 1
      %p52 = scmp.eq.s32.totalorder %s14, 1
      %p53 = scmp.ne.s32.totalorder %s48, %s50
      %p54 = scmp.eq.s32.totalorder %s14, 0
      %p55 = por %p53, %p54
      %p56 = scmp.ne.s32.totalorder %s48, %s50
      %p57 = scmp.eq.s32.totalorder %s19, 1
      %p58 = por %p56, %p57
      %p59 = scmp.ne.s32.totalorder %s50, %s51
      %p60 = scmp.eq.s32.totalorder %s19, 0
      %p61 = por %p59, %p60
      %p62 = scmp.ne.s32.totalorder %s50, %s51
      %p63 = scmp.eq.s32.totalorder %s20, 1
      %p64 = por %p62, %p63
      %p66 = scmp.ne.s32.totalorder %s51, %s65
      %p67 = scmp.eq.s32.totalorder %s20, 0
      %p68 = por %p66, %p67
      %s70 = sadd.s32 %s69, 1
      %p73 = scmp.eq.s32.totalorder %s14, 1
      %p74 = scmp.ne.s32.totalorder %s69, %s71
      %p75 = scmp.eq.s32.totalorder %s14, 0
      %p76 = por %p74, %p75
      %p77 = scmp.ne.s32.totalorder %s69, %s71
      %p78 = scmp.eq.s32.totalorder %s19, 1
      %p79 = por %p77, %p78
      %p80 = scmp.ne.s32.totalorder %s71, %s72
      %p81 = scmp.eq.s32.totalorder %s19, 0
      %p82 = por %p80, %p81
      %p83 = scmp.ne.s32.totalorder %s71, %s72
      %p84 = scmp.eq.s32.totalorder %s20, 1
      %p85 = por %p83, %p84
      %p87 = scmp.ne.s32.totalorder %s72, %s86
      %p88 = scmp.eq.s32.totalorder %s20, 0
      %p89 = por %p87, %p88
      %s91 = sadd.s32 %s90, 1
      %p94 = scmp.eq.s32.totalorder %s14, 1
      %p95 = scmp.ne.s32.totalorder %s90, %s92
      %p96 = scmp.eq.s32.totalorder %s14, 0
      %p97 = por %p95, %p96
      %p98 = scmp.ne.s32.totalorder %s90, %s92
      %p99 = scmp.eq.s32.totalorder %s19, 1
      %p100 = por %p98, %p99
      %p101 = scmp.ne.s32.totalorder %s92, %s93
      %p102 = scmp.eq.s32.totalorder %s19, 0
      %p103 = por %p101, %p102
      %p104 = scmp.ne.s32.totalorder %s92, %s93
      %p105 = scmp.eq.s32.totalorder %s20, 1
      %p106 = por %p104, %p105
      %p108 = scmp.ne.s32.totalorder %s93, %s107
      %p109 = scmp.eq.s32.totalorder %s20, 0
      %p110 = por %p108, %p109
      %s112 = sadd.s32 %s111, 1
      %p115 = scmp.eq.s32.totalorder %s14, 1
      %p116 = scmp.ne.s32.totalorder %s111, %s113
      %p117 = scmp.eq.s32.totalorder %s14, 0
      %p118 = por %p116, %p117
      %p119 = scmp.ne.s32.totalorder %s111, %s113
      %p120 = scmp.eq.s32.totalorder %s19, 1
      %p121 = por %p119, %p120
      %p122 = scmp.ne.s32.totalorder %s113, %s114
      %p123 = scmp.eq.s32.totalorder %s19, 0
      %p124 = por %p122, %p123
      %p125 = scmp.ne.s32.totalorder %s113, %s114
      %p126 = scmp.eq.s32.totalorder %s20, 1
      %p127 = por %p125, %p126
      %p129 = scmp.ne.s32.totalorder %s114, %s128
      %p130 = scmp.eq.s32.totalorder %s20, 0
      %p131 = por %p129, %p130
      %s132 = ssub.s32 %s14, %s21
      %p133 = scmp.eq.s32.totalorder %s132, 0
      %s135 = sadd.s32 %s134, 1
      %s136 = scalar_select %p133, %s134, %s135
      %p139 = pneg %p133
      %p140 = scmp.eq.s32.totalorder %s14, 1
      %p141 = por %p139, %p140
      %p142 = scmp.ne.s32.totalorder %s134, %s137
      %p143 = scmp.eq.s32.totalorder %s14, 0
      %p144 = por %p142, %p143
      %p145 = scmp.ne.s32.totalorder %s134, %s137
      %p146 = scmp.eq.s32.totalorder %s19, 1
      %p147 = por %p145, %p146
      %p148 = scmp.ne.s32.totalorder %s137, %s138
      %p149 = scmp.eq.s32.totalorder %s19, 0
      %p150 = por %p148, %p149
      %p151 = scmp.ne.s32.totalorder %s137, %s138
      %p152 = scmp.eq.s32.totalorder %s20, 1
      %p153 = por %p151, %p152
      %p155 = scmp.ne.s32.totalorder %s138, %s154
      %p156 = scmp.eq.s32.totalorder %s20, 0
      %p157 = por %p155, %p156
      %p158 = scmp.le.s32.totalorder 1, %s14
      %p159 = scmp.lt.s32.totalorder %s14, 3
      %p160 = pnand %p158, %p159
      %p161 = pneg %p160
      // Predicated region
      $region9: #{tpu_custom_call.1} parent=5 // pred_check
        _
      $region10: #{tpu_custom_call.1} parent=5 // pred_check_branch
        %163 = sbr.rel (%p160) target = $region12
      $region11: #{tpu_custom_call.1} parent=5 // pred_region
        %s164 = ssub.s32 %s14, 1
        // Predicated region
        $region13: #{tpu_custom_call.1} parent=11 // pred_check
          %p165 = pneg %p61
        $region14: #{tpu_custom_call.1} parent=11 // pred_check_branch
          %167 = sbr.rel (%p165) target = $region16
        $region15: #{tpu_custom_call.1} parent=11 // pred_region
          _
        $region16: #{tpu_custom_call.1} parent=11 // pred_fallthru
          _
        // Predicated region
        $region17: #{tpu_custom_call.1} parent=11 // pred_check
          %p168 = pneg %p82
        $region18: #{tpu_custom_call.1} parent=11 // pred_check_branch
          %170 = sbr.rel (%p168) target = $region20
        $region19: #{tpu_custom_call.1} parent=11 // pred_region
          _
        $region20: #{tpu_custom_call.1} parent=11 // pred_fallthru
          _
        // Predicated region
        $region21: #{tpu_custom_call.1} parent=11 // pred_check
          %p171 = pneg %p103
        $region22: #{tpu_custom_call.1} parent=11 // pred_check_branch
          %173 = sbr.rel (%p171) target = $region24
        $region23: #{tpu_custom_call.1} parent=11 // pred_region
          _
        $region24: #{tpu_custom_call.1} parent=11 // pred_fallthru
          _
        // Predicated region
        $region25: #{tpu_custom_call.1} parent=11 // pred_check
          %p174 = pneg %p124
        $region26: #{tpu_custom_call.1} parent=11 // pred_check_branch
          %176 = sbr.rel (%p174) target = $region28
        $region27: #{tpu_custom_call.1} parent=11 // pred_region
          _
        $region28: #{tpu_custom_call.1} parent=11 // pred_fallthru
          _
      $region12: #{tpu_custom_call.1} parent=5 // pred_fallthru
        _
      %p177 = scmp.lt.s32.totalorder %s14, 2
      // Predicated region
      $region29: #{tpu_custom_call.1} parent=5 // pred_check
        %p178 = pneg %p177
      $region30: #{tpu_custom_call.1} parent=5 // pred_check_branch
        %180 = sbr.rel (%p178) target = $region32
      $region31: #{tpu_custom_call.1} parent=5 // pred_region
        // Predicated region
        $region33: #{tpu_custom_call.1} parent=31 // pred_check
          %p181 = pneg %p34
        $region34: #{tpu_custom_call.1} parent=31 // pred_check_branch
          %183 = sbr.rel (%p181) target = $region36
        $region35: #{tpu_custom_call.1} parent=31 // pred_region
          %p184 = scmp.lt.s32.totalorder %s14, 1
          %s185 = scalar_select %p184, %s14, 1
          %s186 = smul.addr %s185, 8
          %s187 = scalar_lea.vmem %s0, %s186
        $region36: #{tpu_custom_call.1} parent=31 // pred_fallthru
          _
      $region32: #{tpu_custom_call.1} parent=5 // pred_fallthru
        _
      %p188 = scmp.le.s32.totalorder 1, %s14
      %p189 = scmp.lt.s32.totalorder %s14, 3
      %p190 = pnand %p188, %p189
      %p191 = pneg %p190
      // Predicated region
      $region37: #{tpu_custom_call.1} parent=5 // pred_check
        _
      $region38: #{tpu_custom_call.1} parent=5 // pred_check_branch
        %193 = sbr.rel (%p190) target = $region40
      $region39: #{tpu_custom_call.1} parent=5 // pred_region
        %s194 = ssub.s32 %s14, 1
        %p195 = scmp.lt.s32.totalorder %s19, 1
        %s196 = scalar_select %p195, %s19, 1
        %s197 = smul.addr %s196, 8
        %s198 = scalar_lea.vmem %s0, %s197
        %p199 = pneg %p40
        %p200 = pneg %p37
        %p201 = pneg %p61
        %p202 = pneg %p58
        %p203 = pneg %p82
        %p204 = pneg %p79
        %p205 = pneg %p103
        %p206 = pneg %p100
        %p207 = pneg %p124
        %p208 = pneg %p121
        %p209 = pneg %p150
        %p210 = pneg %p147
        %s211 = sand.u32 %s137, 1
        %s212 = scalar_lea.sflag [#allocation3], %s211
        %s213 = sand.u32 %s137, 1
        %s214 = smul.addr %s213, 8
        %s215 = scalar_lea.vmem [#allocation2], %s214
        %p216 = scmp.lt.s32.totalorder %s19, 1
        %s217 = scalar_select %p216, %s19, 1
        %s218 = smul.addr %s217, 8
        %s219 = scalar_lea.vmem %s0, %s218
        %v220 = vld [vmem:[%s1] sm:$0xff]
        %v221 = vld [vmem:[%s1 + $0x8] sm:$0xff]
        %v222 = vld [vmem:[%s1 + $0x10] sm:$0xff]
        %v223 = vld [vmem:[%s1 + $0x18] sm:$0xff]
        %v224 = vld [vmem:[%s1 + $0x20] sm:$0x1]
        %v225 = vld [vmem:[%s2] sm:$0x1]
        %v226 = vld [vmem:[%s3] sm:$0xff]
        %v227 = vld [vmem:[%s3 + $0x8] sm:$0xff]
        %v228 = vld [vmem:[%s3 + $0x10] sm:$0xff]
        %v229 = vld [vmem:[%s3 + $0x18] sm:$0xff]
        %v230 = vld [vmem:[%s3 + $0x20] sm:$0x1]
        %v231 = vld [vmem:[%s4] sm:$0x1]
        %v232 = vld [vmem:[%s219] sm:$0xff]
        %v234 = vlaneseq
        %v235 = vshrl.u32 %v234, 7
        %v236 = vsub.s32 0, %v235
        %v237 = vrot.slane %v225, %v236
        %vm239 = vcmask 269312
        %v241 = vsel %vm239, %v232, 0
        %vm243 = vcmask 1040384
        %v245 = vsel %vm243, %v224, 0
        %247 = vmatprep.subr.mxu0 0.0
        %248 = vmatpush1.msra.mxu0 %v220
        %249 = vmatprep.subr.mxu0 0.0
        %250 = vmatpush1.msra.mxu0 %v221
        %251 = vmatprep.subr.mxu0 0.0
        %252 = vmatpush1.msra.mxu0 %v222
        %253 = vmatprep.subr.mxu0 0.0
        %254 = vmatpush1.msra.mxu0 %v223
        %255 = vmatprep.subr.mxu0 0.0
        %256 = vmatpush1.msra.mxu0 %v245
        %257 = vmatprep.subr.mxu0 0.0
        %258 = vmatpush1.msra.mxu0 0.0
        %259 = vmatprep.subr.mxu0 0.0
        %260 = vmatpush1.msra.mxu0 0.0
        %261 = vmatprep.subr.mxu0 0.0
        %262 = vmatpush1.msra.mxu0 0.0
        %263 = vmatprep.subr.mxu0 0.0
        %264 = vmatpush1.msra.mxu0 0.0
        %265 = vmatprep.subr.mxu0 0.0
        %266 = vmatpush1.msra.mxu0 0.0
        %267 = vmatprep.subr.mxu0 0.0
        %268 = vmatpush1.msra.mxu0 0.0
        %269 = vmatprep.subr.mxu0 0.0
        %270 = vmatpush1.msra.mxu0 0.0
        %271 = vmatprep.subr.mxu0 0.0
        %272 = vmatpush1.msra.mxu0 0.0
        %273 = vmatprep.subr.mxu0 0.0
        %274 = vmatpush1.msra.mxu0 0.0
        %275 = vmatprep.subr.mxu0 0.0
        %276 = vmatpush1.msra.mxu0 0.0
        %277 = vmatprep.subr.mxu0 0.0
        %278 = vmatpush1.msra.mxu0 0.0
        %279 = vmatprep.subr.mxu0 0.0
        %280 = vmatpush1.msra.mxu0 0.0
        %281 = vmatprep.subr.mxu0 0.0
        %282 = vmatpush1.msra.mxu0 0.0
        %283 = vmatprep.subr.mxu0 0.0
        %284 = vmatpush1.msra.mxu0 0.0
        %285 = vmatprep.subr.mxu0 0.0
        %286 = vmatpush1.msra.mxu0 0.0
        %287 = vmatprep.subr.mxu0 0.0
        %288 = vmatpush1.msra.mxu0 0.0
        %289 = vmatprep.subr.mxu0 0.0
        %290 = vmatpush1.msra.mxu0 0.0
        %291 = vmatprep.subr.mxu0 0.0
        %292 = vmatpush1.msra.mxu0 0.0
        %293 = vmatprep.subr.mxu0 0.0
        %294 = vmatpush1.msra.mxu0 0.0
        %295 = vmatprep.subr.mxu0 0.0
        %296 = vmatpush1.msra.mxu0 0.0
        %297 = vmatprep.subr.mxu0 0.0
        %298 = vmatpush1.msra.mxu0 0.0
        %299 = vmatprep.subr.mxu0 0.0
        %300 = vmatpush1.msra.mxu0 0.0
        %301 = vmatprep.subr.mxu0 0.0
        %302 = vmatpush1.msra.mxu0 0.0
        %303 = vmatprep.subr.mxu0 0.0
        %304 = vmatpush1.msra.mxu0 0.0
        %305 = vmatprep.subr.mxu0 0.0
        %306 = vmatpush1.msra.mxu0 0.0
        %307 = vmatprep.subr.mxu0 0.0
        %308 = vmatpush1.msra.mxu0 0.0
        %309 = vmatprep.subr.mxu0 0.0
        %310 = vmatpush1.msra.mxu0 0.0
        %311 = vmatprep.mubr.f32.mxu0 0.0
        %312 = vmatmul.mubr.f32.gmra.mrb[0].mxu0 %v241
        %v313 = vpop.f32.mrb[0].mxu0
        %v314 = vadd.f32 %v237, %v313
        %v315 = vpop.f32.mrb[0].mxu0
        %316 = vdwg.mxu0
        %v317 = vmax.f32 %v314, 0.0
        %v319 = vsel %vm239, %v317, 0
        %v322 = vsel %vm243, 1.0, 0
        %324 = vmatprep.subr.mxu0 0.0
        %325 = vmatpush1.msra.mxu0 1.0
        %326 = vmatprep.subr.mxu0 0.0
        %327 = vmatpush1.msra.mxu0 1.0
        %328 = vmatprep.subr.mxu0 0.0
        %329 = vmatpush1.msra.mxu0 1.0
        %330 = vmatprep.subr.mxu0 0.0
        %331 = vmatpush1.msra.mxu0 1.0
        %332 = vmatprep.subr.mxu0 0.0
        %333 = vmatpush1.msra.mxu0 %v322
        %334 = vmatprep.subr.mxu0 0.0
        %335 = vmatpush1.msra.mxu0 0.0
        %336 = vmatprep.subr.mxu0 0.0
        %337 = vmatpush1.msra.mxu0 0.0
        %338 = vmatprep.subr.mxu0 0.0
        %339 = vmatpush1.msra.mxu0 0.0
        %340 = vmatprep.subr.mxu0 0.0
        %341 = vmatpush1.msra.mxu0 0.0
        %342 = vmatprep.subr.mxu0 0.0
        %343 = vmatpush1.msra.mxu0 0.0
        %344 = vmatprep.subr.mxu0 0.0
        %345 = vmatpush1.msra.mxu0 0.0
        %346 = vmatprep.subr.mxu0 0.0
        %347 = vmatpush1.msra.mxu0 0.0
        %348 = vmatprep.subr.mxu0 0.0
        %349 = vmatpush1.msra.mxu0 0.0
        %350 = vmatprep.subr.mxu0 0.0
        %351 = vmatpush1.msra.mxu0 0.0
        %352 = vmatprep.subr.mxu0 0.0
        %353 = vmatpush1.msra.mxu0 0.0
        %354 = vmatprep.subr.mxu0 0.0
        %355 = vmatpush1.msra.mxu0 0.0
        %356 = vmatprep.subr.mxu0 0.0
        %357 = vmatpush1.msra.mxu0 0.0
        %358 = vmatprep.subr.mxu0 0.0
        %359 = vmatpush1.msra.mxu0 0.0
        %360 = vmatprep.subr.mxu0 0.0
        %361 = vmatpush1.msra.mxu0 0.0
        %362 = vmatprep.subr.mxu0 0.0
        %363 = vmatpush1.msra.mxu0 0.0
        %364 = vmatprep.subr.mxu0 0.0
        %365 = vmatpush1.msra.mxu0 0.0
        %366 = vmatprep.subr.mxu0 0.0
        %367 = vmatpush1.msra.mxu0 0.0
        %368 = vmatprep.subr.mxu0 0.0
        %369 = vmatpush1.msra.mxu0 0.0
        %370 = vmatprep.subr.mxu0 0.0
        %371 = vmatpush1.msra.mxu0 0.0
        %372 = vmatprep.subr.mxu0 0.0
        %373 = vmatpush1.msra.mxu0 0.0
        %374 = vmatprep.subr.mxu0 0.0
        %375 = vmatpush1.msra.mxu0 0.0
        %376 = vmatprep.subr.mxu0 0.0
        %377 = vmatpush1.msra.mxu0 0.0
        %378 = vmatprep.subr.mxu0 0.0
        %379 = vmatpush1.msra.mxu0 0.0
        %380 = vmatprep.subr.mxu0 0.0
        %381 = vmatpush1.msra.mxu0 0.0
        %382 = vmatprep.subr.mxu0 0.0
        %383 = vmatpush1.msra.mxu0 0.0
        %384 = vmatprep.subr.mxu0 0.0
        %385 = vmatpush1.msra.mxu0 0.0
        %386 = vmatprep.subr.mxu0 0.0
        %387 = vmatpush1.msra.mxu0 0.0
        %388 = vmatprep.mubr.f32.mxu0 0.0
        %389 = vmatmul.mubr.f32.gmra.mrb[0].mxu0 %v319
        %v390 = vpop.f32.mrb[0].mxu0
        %v391 = vadd.f32 0.0, %v390
        %v392 = vpop.f32.mrb[0].mxu0
        %393 = vdwg.mxu0
        %v394 = vmul.f32 %v317, %v317
        %v396 = vsel %vm239, %v394, 0
        %398 = vmatprep.subr.mxu0 0.0
        %399 = vmatpush1.msra.mxu0 1.0
        %400 = vmatprep.subr.mxu0 0.0
        %401 = vmatpush1.msra.mxu0 1.0
        %402 = vmatprep.subr.mxu0 0.0
        %403 = vmatpush1.msra.mxu0 1.0
        %404 = vmatprep.subr.mxu0 0.0
        %405 = vmatpush1.msra.mxu0 1.0
        %406 = vmatprep.subr.mxu0 0.0
        %407 = vmatpush1.msra.mxu0 %v322
        %408 = vmatprep.subr.mxu0 0.0
        %409 = vmatpush1.msra.mxu0 0.0
        %410 = vmatprep.subr.mxu0 0.0
        %411 = vmatpush1.msra.mxu0 0.0
        %412 = vmatprep.subr.mxu0 0.0
        %413 = vmatpush1.msra.mxu0 0.0
        %414 = vmatprep.subr.mxu0 0.0
        %415 = vmatpush1.msra.mxu0 0.0
        %416 = vmatprep.subr.mxu0 0.0
        %417 = vmatpush1.msra.mxu0 0.0
        %418 = vmatprep.subr.mxu0 0.0
        %419 = vmatpush1.msra.mxu0 0.0
        %420 = vmatprep.subr.mxu0 0.0
        %421 = vmatpush1.msra.mxu0 0.0
        %422 = vmatprep.subr.mxu0 0.0
        %423 = vmatpush1.msra.mxu0 0.0
        %424 = vmatprep.subr.mxu0 0.0
        %425 = vmatpush1.msra.mxu0 0.0
        %426 = vmatprep.subr.mxu0 0.0
        %427 = vmatpush1.msra.mxu0 0.0
        %428 = vmatprep.subr.mxu0 0.0
        %429 = vmatpush1.msra.mxu0 0.0
        %430 = vmatprep.subr.mxu0 0.0
        %431 = vmatpush1.msra.mxu0 0.0
        %432 = vmatprep.subr.mxu0 0.0
        %433 = vmatpush1.msra.mxu0 0.0
        %434 = vmatprep.subr.mxu0 0.0
        %435 = vmatpush1.msra.mxu0 0.0
        %436 = vmatprep.subr.mxu0 0.0
        %437 = vmatpush1.msra.mxu0 0.0
        %438 = vmatprep.subr.mxu0 0.0
        %439 = vmatpush1.msra.mxu0 0.0
        %440 = vmatprep.subr.mxu0 0.0
        %441 = vmatpush1.msra.mxu0 0.0
        %442 = vmatprep.subr.mxu0 0.0
        %443 = vmatpush1.msra.mxu0 0.0
        %444 = vmatprep.subr.mxu0 0.0
        %445 = vmatpush1.msra.mxu0 0.0
        %446 = vmatprep.subr.mxu0 0.0
        %447 = vmatpush1.msra.mxu0 0.0
        %448 = vmatprep.subr.mxu0 0.0
        %449 = vmatpush1.msra.mxu0 0.0
        %450 = vmatprep.subr.mxu0 0.0
        %451 = vmatpush1.msra.mxu0 0.0
        %452 = vmatprep.subr.mxu0 0.0
        %453 = vmatpush1.msra.mxu0 0.0
        %454 = vmatprep.subr.mxu0 0.0
        %455 = vmatpush1.msra.mxu0 0.0
        %456 = vmatprep.subr.mxu0 0.0
        %457 = vmatpush1.msra.mxu0 0.0
        %458 = vmatprep.subr.mxu0 0.0
        %459 = vmatpush1.msra.mxu0 0.0
        %460 = vmatprep.subr.mxu0 0.0
        %461 = vmatpush1.msra.mxu0 0.0
        %462 = vmatprep.mubr.f32.mxu0 0.0
        %463 = vmatmul.mubr.f32.gmra.mrb[0].mxu0 %v396
        %v464 = vpop.f32.mrb[0].mxu0
        %v465 = vadd.f32 0.0, %v464
        %v466 = vpop.f32.mrb[0].mxu0
        %467 = vdwg.mxu0
        %v468 = vmul.f32 %v391, 0.030303031
        %v469 = vmul.f32 %v465, 0.030303031
        %v470 = vmul.f32 %v468, %v468
        %v471 = vsub.f32 %v469, %v470
        %v472 = vmax.f32 %v471, 0.0
        %v473 = vadd.f32 %v472, 1e-12
        %v474 = vrsqrt.pop %v473
        %476 = vset.pattern.permute.xlu0 0
        %477 = vperm.xlu0 %476, %v468
        %v478 = vpop.permute.xlu0 %477
        %v480 = vsub.f32 %v317, %v478
        %482 = vset.pattern.permute.xlu0 0
        %483 = vperm.xlu0 %482, %v474
        %v484 = vpop.permute.xlu0 %483
        %v486 = vmul.f32 %v480, %v484
        %v488 = vlaneseq
        %v489 = vshrl.u32 %v488, 7
        %v490 = vsub.s32 0, %v489
        %v491 = vrot.slane %v231, %v490
        %v494 = vsel %vm239, %v486, 0
        %v497 = vsel %vm243, %v230, 0
        %499 = vmatprep.subr.mxu0 0.0
        %500 = vmatpush1.msra.mxu0 %v226
        %501 = vmatprep.subr.mxu0 0.0
        %502 = vmatpush1.msra.mxu0 %v227
        %503 = vmatprep.subr.mxu0 0.0
        %504 = vmatpush1.msra.mxu0 %v228
        %505 = vmatprep.subr.mxu0 0.0
        %506 = vmatpush1.msra.mxu0 %v229
        %507 = vmatprep.subr.mxu0 0.0
        %508 = vmatpush1.msra.mxu0 %v497
        %509 = vmatprep.subr.mxu0 0.0
        %510 = vmatpush1.msra.mxu0 0.0
        %511 = vmatprep.subr.mxu0 0.0
        %512 = vmatpush1.msra.mxu0 0.0
        %513 = vmatprep.subr.mxu0 0.0
        %514 = vmatpush1.msra.mxu0 0.0
        %515 = vmatprep.subr.mxu0 0.0
        %516 = vmatpush1.msra.mxu0 0.0
        %517 = vmatprep.subr.mxu0 0.0
        %518 = vmatpush1.msra.mxu0 0.0
        %519 = vmatprep.subr.mxu0 0.0
        %520 = vmatpush1.msra.mxu0 0.0
        %521 = vmatprep.subr.mxu0 0.0
        %522 = vmatpush1.msra.mxu0 0.0
        %523 = vmatprep.subr.mxu0 0.0
        %524 = vmatpush1.msra.mxu0 0.0
        %525 = vmatprep.subr.mxu0 0.0
        %526 = vmatpush1.msra.mxu0 0.0
        %527 = vmatprep.subr.mxu0 0.0
        %528 = vmatpush1.msra.mxu0 0.0
        %529 = vmatprep.subr.mxu0 0.0
        %530 = vmatpush1.msra.mxu0 0.0
        %531 = vmatprep.subr.mxu0 0.0
        %532 = vmatpush1.msra.mxu0 0.0
        %533 = vmatprep.subr.mxu0 0.0
        %534 = vmatpush1.msra.mxu0 0.0
        %535 = vmatprep.subr.mxu0 0.0
        %536 = vmatpush1.msra.mxu0 0.0
        %537 = vmatprep.subr.mxu0 0.0
        %538 = vmatpush1.msra.mxu0 0.0
        %539 = vmatprep.subr.mxu0 0.0
        %540 = vmatpush1.msra.mxu0 0.0
        %541 = vmatprep.subr.mxu0 0.0
        %542 = vmatpush1.msra.mxu0 0.0
        %543 = vmatprep.subr.mxu0 0.0
        %544 = vmatpush1.msra.mxu0 0.0
        %545 = vmatprep.subr.mxu0 0.0
        %546 = vmatpush1.msra.mxu0 0.0
        %547 = vmatprep.subr.mxu0 0.0
        %548 = vmatpush1.msra.mxu0 0.0
        %549 = vmatprep.subr.mxu0 0.0
        %550 = vmatpush1.msra.mxu0 0.0
        %551 = vmatprep.subr.mxu0 0.0
        %552 = vmatpush1.msra.mxu0 0.0
        %553 = vmatprep.subr.mxu0 0.0
        %554 = vmatpush1.msra.mxu0 0.0
        %555 = vmatprep.subr.mxu0 0.0
        %556 = vmatpush1.msra.mxu0 0.0
        %557 = vmatprep.subr.mxu0 0.0
        %558 = vmatpush1.msra.mxu0 0.0
        %559 = vmatprep.subr.mxu0 0.0
        %560 = vmatpush1.msra.mxu0 0.0
        %561 = vmatprep.subr.mxu0 0.0
        %562 = vmatpush1.msra.mxu0 0.0
        %563 = vmatprep.mubr.f32.mxu0 0.0
        %564 = vmatmul.mubr.f32.gmra.mrb[0].mxu0 %v494
        %v565 = vpop.f32.mrb[0].mxu0
        %v566 = vadd.f32 %v491, %v565
        %v567 = vpop.f32.mrb[0].mxu0
        %568 = vdwg.mxu0
        %vm569 = vcmask 171008
        %570 = vst.msk [vmem:[%s215] sm:$0xff] %vm569, %v566
        %s571 = sand.u32 %s137, 1
        %s572 = scalar_lea.sflag [#allocation3], %s571
        %s573 = sand.u32 %s137, 1
        %s574 = smul.addr %s573, 8
        %s575 = scalar_lea.vmem [#allocation2], %s574
        // Predicated region
        $region41: #{tpu_custom_call.1} parent=39 // pred_check
          %p576 = pneg %p147
        $region42: #{tpu_custom_call.1} parent=39 // pred_check_branch
          %578 = sbr.rel (%p576) target = $region44
        $region43: #{tpu_custom_call.1} parent=39 // pred_region
          %s580 = ssub.s32 128, 128
          %581 = vsyncadd %s572, %s580
          %s582 = smul.addr %s19, 128
          %s583 = scalar_lea.hbm %s5, %s582
          %s585 = sshll.u32 %s575, 4
          %s586 = int_to_ptr.vmem [resolvable:$true] %s585
          %588 = dma.vmem_to_hbm [thread:$0]  %s586, 128, %s583, %s572
        $region44: #{tpu_custom_call.1} parent=39 // pred_fallthru
          _
      $region40: #{tpu_custom_call.1} parent=5 // pred_fallthru
        _
      %p589 = scmp.le.s32.totalorder 2, %s14
      // Predicated region
      $region45: #{tpu_custom_call.1} parent=5 // pred_check
        %p590 = pneg %p589
      $region46: #{tpu_custom_call.1} parent=5 // pred_check_branch
        %592 = sbr.rel (%p590) target = $region48
      $region47: #{tpu_custom_call.1} parent=5 // pred_region
        %s593 = ssub.s32 %s14, 2
        // Predicated region
        $region49: #{tpu_custom_call.1} parent=47 // pred_check
          %p594 = pneg %p153
        $region50: #{tpu_custom_call.1} parent=47 // pred_check_branch
          %596 = sbr.rel (%p594) target = $region52
        $region51: #{tpu_custom_call.1} parent=47 // pred_region
          %s597 = sand.u32 %s138, 1
          %s598 = scalar_lea.sflag [#allocation3], %s597
          %s599 = sand.u32 %s138, 1
          %s600 = smul.addr %s599, 8
          %s601 = scalar_lea.vmem [#allocation2], %s600
          %602 = dma.done %s598, 128
        $region52: #{tpu_custom_call.1} parent=47 // pred_fallthru
          _
      $region48: #{tpu_custom_call.1} parent=5 // pred_fallthru
        _
    $region6: #{tpu_custom_call.1} parent=1 // loop_footer
      %s18 = sadd.s32 1, %s14
    $region7: #{tpu_custom_call.1} parent=1 // loop_footer_branch
      %13 = sbr.rel target = $region3
    $region8: #{tpu_custom_call.1} parent=1 // loop_exit
      _
    %603 = vsyncpa [#allocation3], 1
    %s604 = scalar_lea.sflag [#allocation3], 1
    %605 = vsyncpa %s604, 1

</llo_original>
